<compile_context>
chip_gen: v5e
topology: v5e:2x2
jax: 0.10.0
libtpu: 0.0.40
codegen_flags: <defaults>
</compile_context>

<pallas_src>
import functools
from typing import NamedTuple

import jax
import jax.numpy as jnp
from jax.experimental import pallas as pl
from jax.experimental.pallas import tpu as pltpu


_ACTIVATIONS = {
    "tanh": jnp.tanh,
    "relu": lambda x: jnp.maximum(x, 0.0),
    "sigmoid": jax.nn.sigmoid,
}
_TRANSCENDENTAL = ("tanh", "sigmoid")


class PackedLSTMParams(NamedTuple):
    uw: jax.Array        # (od_pad + input_dim, 4*od_pad): [[Wz|Wg|Wr|0]; 0; [Uz|Ug|Ur|Uh]]
    wh: jax.Array        # (od_pad, od_pad): zero-padded Wh
    b: jax.Array         # (1, 4*od_pad): [bz|bg|br|bh], zero-padded per gate
    input_dim: int
    output_dim: int
    od_pad: int


def _round_up(x, m):
    return ((x + m - 1) // m) * m


def pack_lstm_layer_params(params, dtype=None):
    """One-time packing of the 12 per-gate parameters into 3 fused arrays.

    `dtype` selects the MXU operand precision (e.g. jnp.bfloat16 on v6e/v7x);
    None keeps the parameter dtype.  Call this ONCE outside the training step.
    Accepts biases shaped (1, output_dim) or (output_dim,).
    """
    Uz, Ug, Ur, Uh, Wz, Wg, Wr, Wh, bz, bg, br, bh = params
    input_dim, output_dim = Uz.shape
    od_pad = _round_up(output_dim, 128)
    if dtype is None:
        dtype = Uz.dtype

    def pad_cols(a):
        a = jnp.asarray(a, dtype)
        return jnp.pad(a, ((0, 0), (0, od_pad - output_dim)))

    def as_bias(b):
        b = jnp.asarray(b, dtype).reshape(1, output_dim)
        return jnp.pad(b, ((0, 0), (0, od_pad - output_dim)))

    # Row layout matches XS = [S_pad | X]:
    #   rows [0, od)        -> real S columns -> W gates (Wh handled separately)
    #   rows [od, od_pad)   -> S zero-padding -> zero rows
    #   rows [od_pad, +in)  -> X columns      -> U gates
    w_rows = jnp.concatenate(
        [pad_cols(Wz), pad_cols(Wg), pad_cols(Wr),
         jnp.zeros((output_dim, od_pad), dtype)], axis=1)
    w_rows = jnp.pad(w_rows, ((0, od_pad - output_dim), (0, 0)))
    u_rows = jnp.concatenate(
        [pad_cols(Uz), pad_cols(Ug), pad_cols(Ur), pad_cols(Uh)], axis=1)
    uw = jnp.concatenate([w_rows, u_rows], axis=0)        # (od_pad + in, 4*od_pad)

    wh = jnp.pad(jnp.asarray(Wh, dtype),
                 ((0, od_pad - output_dim), (0, od_pad - output_dim)))
    b_all = jnp.concatenate([as_bias(bz), as_bias(bg), as_bias(br), as_bias(bh)],
                            axis=1)                        # (1, 4*od_pad)
    return PackedLSTMParams(uw, wh, b_all, input_dim, output_dim, od_pad)


def _lstm_layer_kernel(xs_ref, uw_ref, wh_ref, b_ref, out_ref, *,
                       trans1, trans2, od_pad):
    """One batch tile of the DGM LSTMLayer forward (single fused projection)."""
    act1 = _ACTIVATIONS[trans1]
    act2 = _ACTIVATIONS[trans2]

    uw = uw_ref[...]
    xs = xs_ref[...]                                # (TB, od_pad + input_dim)
    s_f32 = xs[:, :od_pad].astype(jnp.float32)      # lane-aligned view of S_pad
    xs_mxu = xs.astype(uw.dtype)                    # bf16 fast path if packed bf16

    # One wide MXU call: pre = [S_pad | X] @ [[W...]; 0; [U...]] + [bz|bg|br|bh].
    pre = jnp.dot(xs_mxu, uw, preferred_element_type=jnp.float32)
    pre = pre + b_ref[...].astype(jnp.float32)      # (TB, 4*od_pad), f32

    # Gate slices land on multiples of od_pad (a multiple of 128) -> lane-aligned.
    z = act1(pre[:, 0 * od_pad:1 * od_pad])
    g = act1(pre[:, 1 * od_pad:2 * od_pad])
    r = act1(pre[:, 2 * od_pad:3 * od_pad])

    # H gate needs (S * R) @ Wh -- only possible once R is known.
    sr = (s_f32 * r).astype(uw.dtype)
    h = act2(pre[:, 3 * od_pad:]
             + jnp.dot(sr, wh_ref[...], preferred_element_type=jnp.float32))

    # Element-wise tail stays f32 (v5e has no bf16 VPU); one lane-dense store.
    out_ref[...] = ((1.0 - g) * h + z * s_f32).astype(out_ref.dtype)


def _choose_batch_tile(B, min_steps=4):
    """Largest sublane-aligned tile giving >= min_steps grid steps (>=2/TC on v7x)."""
    for t in (1024, 512, 256, 128, 64, 32, 16, 8):
        if pl.cdiv(B, t) >= min_steps:
            return t
    return 8


def _resident_spec(shape):
    """BlockSpec for weights/biases whose block index never changes."""
    index_map = lambda i: (0,) * len(shape)
    if hasattr(pl, "Buffered"):
        # Constant block index: double buffering would only double resident VMEM.
        return pl.BlockSpec(shape, index_map, pipeline_mode=pl.Buffered(1))
    return pl.BlockSpec(shape, index_map)


def _vmem_capacity_bytes():
    try:
        cap = getattr(pltpu.get_tpu_info(), "vmem_capacity_bytes", None)
        if cap:
            return int(cap)
    except Exception:  # hardware query only; never guards the kernel itself
        pass
    return 64 * 2 ** 20  # conservative default: v7x per-TensorCore VMEM


def lstm_layer_forward(S, X, packed, *, trans1="tanh", trans2="tanh",
                       batch_tile=None):
    """Pallas-backed forward matching LSTMLayer.forward(S, X).

    `packed` comes from pack_lstm_layer_params (call it once, outside the
    per-step path).
    """
    B, input_dim = X.shape
    Bs, output_dim = S.shape
    assert B == Bs
    assert input_dim == packed.input_dim and output_dim == packed.output_dim
    od_pad = packed.od_pad
    k_dim = od_pad + input_dim

    if batch_tile is None:
        batch_tile = _choose_batch_tile(B)
    grid_steps = pl.cdiv(B, batch_tile)
    b_pad = grid_steps * batch_tile

    # Wrapper-side layout plumbing (not compute): lane-pad S, sublane-pad the
    # batch, and concatenate [S_pad | X] so the kernel sees one lane-contiguous
    # MXU operand whose S part is a lane-aligned slice.
    s_padded = jnp.pad(S, ((0, b_pad - B), (0, od_pad - output_dim)))
    x_padded = jnp.pad(X, ((0, b_pad - B), (0, 0)))
    xs = jnp.concatenate([s_padded, x_padded], axis=1)     # (b_pad, od_pad + in)

    def nbytes(a):
        return int(a.size) * a.dtype.itemsize

    weight_bytes = nbytes(packed.uw) + nbytes(packed.wh) + nbytes(packed.b)
    # 2x input tile + 2x output tile buffers, plus ~12*od_pad f32 row-temporaries
    # (pre: 4*od_pad, z/g/r/s/sr/h/s_new: ~8*od_pad).
    tile_bytes = (2 * batch_tile * k_dim * xs.dtype.itemsize
                  + 2 * batch_tile * od_pad * S.dtype.itemsize
                  + batch_tile * 12 * od_pad * 4)
    requested = 2 * weight_bytes + tile_bytes
    vmem_limit = min(int(0.85 * _vmem_capacity_bytes()),
                     max(32 * 2 ** 20, 2 * requested))
    # TODO(synk): add a 2-D (batch, gate-column) grid fallback for very large
    # output_dim where the resident packed weights would exceed v7x's 64 MiB VMEM.

    n_transc = 3 * (trans1 in _TRANSCENDENTAL) + (trans2 in _TRANSCENDENTAL)
    cost = pl.CostEstimate(
        flops=2 * b_pad * od_pad * (4 * k_dim + od_pad) + 8 * b_pad * od_pad,
        transcendentals=n_transc * b_pad * od_pad,
        bytes_accessed=nbytes(xs) + b_pad * od_pad * S.dtype.itemsize
                       + weight_bytes,
    )

    kernel = functools.partial(_lstm_layer_kernel, trans1=trans1, trans2=trans2,
                               od_pad=od_pad)

    out_padded = pl.pallas_call(
        kernel,
        out_shape=jax.ShapeDtypeStruct((b_pad, od_pad), S.dtype),
        grid_spec=pltpu.PrefetchScalarGridSpec(
            num_scalar_prefetch=0,
            grid=(grid_steps,),
            in_specs=[
                pl.BlockSpec((batch_tile, k_dim), lambda i: (i, 0)),   # XS tile
                _resident_spec((k_dim, 4 * od_pad)),                   # fused U/W
                _resident_spec((od_pad, od_pad)),                      # Wh
                _resident_spec((1, 4 * od_pad)),                       # fused bias
            ],
            out_specs=pl.BlockSpec((batch_tile, od_pad), lambda i: (i, 0)),
        ),
        compiler_params=pltpu.CompilerParams(
            dimension_semantics=("parallel",),
            vmem_limit_bytes=vmem_limit,
        ),
        cost_estimate=cost,
    )(xs, packed.uw, packed.wh, packed.b)

    # Slice off the batch and lane padding (lane-dense slab -> logical shape).
    return out_padded[:B, :output_dim]


def init_lstm_layer_params(key, input_dim, output_dim, dtype=jnp.float32):
    """Deterministic xavier-normal weights + zero biases (matches __init__)."""
    keys = jax.random.split(key, 8)

    def xavier_normal(k, fan_in, fan_out):
        std = (2.0 / (fan_in + fan_out)) ** 0.5
        return (std * jax.random.normal(k, (fan_in, fan_out))).astype(dtype)

    Uz = xavier_normal(keys[0], input_dim, output_dim)
    Ug = xavier_normal(keys[1], input_dim, output_dim)
    Ur = xavier_normal(keys[2], input_dim, output_dim)
    Uh = xavier_normal(keys[3], input_dim, output_dim)
    Wz = xavier_normal(keys[4], output_dim, output_dim)
    Wg = xavier_normal(keys[5], output_dim, output_dim)
    Wr = xavier_normal(keys[6], output_dim, output_dim)
    Wh = xavier_normal(keys[7], output_dim, output_dim)
    bz = jnp.zeros((1, output_dim), dtype)
    bg = jnp.zeros((1, output_dim), dtype)
    br = jnp.zeros((1, output_dim), dtype)
    bh = jnp.zeros((1, output_dim), dtype)
    return (Uz, Ug, Ur, Uh, Wz, Wg, Wr, Wh, bz, bg, br, bh)


def _reference_forward(S, X, params, trans1="tanh", trans2="tanh"):
    """Pure-JAX reference (mirrors the PyTorch forward)."""
    act1, act2 = _ACTIVATIONS[trans1], _ACTIVATIONS[trans2]
    Uz, Ug, Ur, Uh, Wz, Wg, Wr, Wh, bz, bg, br, bh = params
    Z = act1(X @ Uz + S @ Wz + bz)
    G = act1(X @ Ug + S @ Wg + bg)
    R = act1(X @ Ur + S @ Wr + br)
    H = act2(X @ Uh + (S * R) @ Wh + bh)
    return (1.0 - G) * H + Z * S


if __name__ == "__main__":
    # Multi-tile demo: batch 256 -> batch_tile 64 -> 4 parallel grid steps
    # (>= 2 steps per TensorCore under v7x megacore sharding).
    batch, input_dim, output_dim = 256, 16, 32

    key = jax.random.PRNGKey(0)
    k_params, k_x, k_s = jax.random.split(key, 3)

    params = init_lstm_layer_params(k_params, input_dim, output_dim)
    X = jax.random.normal(k_x, (batch, input_dim), jnp.float32)
    S = jax.random.normal(k_s, (batch, output_dim), jnp.float32)

    # Pack once (outside any per-step path).
    packed_f32 = pack_lstm_layer_params(params)

    out = lstm_layer_forward(S, X, packed_f32, trans1="tanh", trans2="tanh")
    out = jax.block_until_ready(out)

    ref = _reference_forward(S, X, params)
    assert out.shape == (batch, output_dim)
    assert jnp.allclose(out, ref, atol=1e-4, rtol=1e-4), "mismatch vs reference"

    # bf16-MXU fast path (recommended on v6e/v7x): matmul operands bf16,
    # accumulation and element-wise gate math f32.  Expected abs error vs the
    # f32 reference is ~1e-2, so only check shape / finiteness here.
    packed_bf16 = pack_lstm_layer_params(params, dtype=jnp.bfloat16)
    out_bf16 = jax.block_until_ready(lstm_layer_forward(S, X, packed_bf16))
    assert out_bf16.shape == (batch, output_dim)
    assert bool(jnp.all(jnp.isfinite(out_bf16)))

    print("KERNEL_OK")
</pallas_src>

<mosaic_0001>
module attributes {stable_mosaic.version = 11 : i64} {
  func.func @_lstm_layer_kernel(%arg0: i32, %arg1: memref<64x144xf32, #tpu.memory_space<vmem>>, %arg2: memref<144x512xf32, #tpu.memory_space<vmem>>, %arg3: memref<128x128xf32, #tpu.memory_space<vmem>>, %arg4: memref<1x512xf32, #tpu.memory_space<vmem>>, %arg5: memref<64x128xf32, #tpu.memory_space<vmem>>) attributes {dimension_semantics = [#tpu.dimension_semantics<parallel>], iteration_bounds = array<i64: 4>, scalar_prefetch = 0 : i64, scratch_operands = 0 : i64, tpu.core_type = #tpu.core_type<tc>, window_params = [{transform_indices = @transform_0, window_bounds = array<i64: 64, 144>}, {pipeline_mode = #tpu.pipeline_mode<synchronous>, transform_indices = @transform_1, window_bounds = array<i64: 144, 512>}, {pipeline_mode = #tpu.pipeline_mode<synchronous>, transform_indices = @transform_2, window_bounds = array<i64: 128, 128>}, {pipeline_mode = #tpu.pipeline_mode<synchronous>, transform_indices = @transform_3, window_bounds = array<i64: 1, 512>}, {transform_indices = @transform_4, window_bounds = array<i64: 64, 128>}]} {
    %c0 = arith.constant 0 : index
    %c0_0 = arith.constant 0 : index
    %0 = vector.load %arg2[%c0, %c0_0] : memref<144x512xf32, #tpu.memory_space<vmem>>, vector<144x512xf32>
    %c0_1 = arith.constant 0 : index
    %c0_2 = arith.constant 0 : index
    %1 = vector.load %arg1[%c0_1, %c0_2] : memref<64x144xf32, #tpu.memory_space<vmem>>, vector<64x144xf32>
    %2 = vector.extract_strided_slice %1 {offsets = [0, 0], sizes = [64, 128], strides = [1, 1]} : vector<64x144xf32> to vector<64x128xf32>
    %cst = arith.constant dense<0.000000e+00> : vector<64x512xf32>
    %3 = tpu.matmul %1, %0, %cst {dimension_numbers = #tpu.dot_dimension_numbers<[1], [0], [0], [1], [0, 0, 1, 1], [], []>} : vector<64x144xf32>, vector<144x512xf32>, vector<64x512xf32> -> vector<64x512xf32>
    %c0_3 = arith.constant 0 : index
    %c0_4 = arith.constant 0 : index
    %4 = vector.load %arg4[%c0_3, %c0_4] : memref<1x512xf32, #tpu.memory_space<vmem>>, vector<1x512xf32>
    %5 = vector.broadcast %4 : vector<1x512xf32> to vector<64x512xf32>
    %6 = arith.addf %3, %5 : vector<64x512xf32>
    %7 = vector.extract_strided_slice %6 {offsets = [0, 0], sizes = [64, 128], strides = [1, 1]} : vector<64x512xf32> to vector<64x128xf32>
    %8 = math.tanh %7 : vector<64x128xf32>
    %9 = vector.extract_strided_slice %6 {offsets = [0, 128], sizes = [64, 128], strides = [1, 1]} : vector<64x512xf32> to vector<64x128xf32>
    %10 = math.tanh %9 : vector<64x128xf32>
    %11 = vector.extract_strided_slice %6 {offsets = [0, 256], sizes = [64, 128], strides = [1, 1]} : vector<64x512xf32> to vector<64x128xf32>
    %12 = math.tanh %11 : vector<64x128xf32>
    %13 = arith.mulf %2, %12 : vector<64x128xf32>
    %14 = vector.extract_strided_slice %6 {offsets = [0, 384], sizes = [64, 128], strides = [1, 1]} : vector<64x512xf32> to vector<64x128xf32>
    %c0_5 = arith.constant 0 : index
    %c0_6 = arith.constant 0 : index
    %15 = vector.load %arg3[%c0_5, %c0_6] : memref<128x128xf32, #tpu.memory_space<vmem>>, vector<128x128xf32>
    %cst_7 = arith.constant dense<0.000000e+00> : vector<64x128xf32>
    %16 = tpu.matmul %13, %15, %cst_7 {dimension_numbers = #tpu.dot_dimension_numbers<[1], [0], [0], [1], [0, 0, 1, 1], [], []>} : vector<64x128xf32>, vector<128x128xf32>, vector<64x128xf32> -> vector<64x128xf32>
    %17 = arith.addf %14, %16 : vector<64x128xf32>
    %18 = math.tanh %17 : vector<64x128xf32>
    %cst_8 = arith.constant 1.000000e+00 : f32
    %19 = vector.broadcast %cst_8 : f32 to vector<64x128xf32>
    %20 = arith.subf %19, %10 : vector<64x128xf32>
    %21 = arith.mulf %20, %18 : vector<64x128xf32>
    %22 = arith.mulf %8, %2 : vector<64x128xf32>
    %23 = arith.addf %21, %22 : vector<64x128xf32>
    %c0_9 = arith.constant 0 : index
    %c0_10 = arith.constant 0 : index
    %24 = vector.load %arg5[%c0_9, %c0_10] : memref<64x128xf32, #tpu.memory_space<vmem>>, vector<64x128xf32>
    tpu.vector_store %arg5[%c0_9, %c0_10], %23 {strides = array<i32>} : memref<64x128xf32, #tpu.memory_space<vmem>>, vector<64x128xf32>,
    return
  }
  func.func @transform_0(%arg0: i32) -> (i32, i32) {
    %c0_i32 = arith.constant 0 : i32
    %c0_i32_0 = arith.constant 0 : i32
    return %arg0, %c0_i32 : i32, i32
  }
  func.func @transform_1(%arg0: i32) -> (i32, i32) {
    %c0_i32 = arith.constant 0 : i32
    %c0_i32_0 = arith.constant 0 : i32
    %c0_i32_1 = arith.constant 0 : i32
    return %c0_i32, %c0_i32_0 : i32, i32
  }
  func.func @transform_2(%arg0: i32) -> (i32, i32) {
    %c0_i32 = arith.constant 0 : i32
    %c0_i32_0 = arith.constant 0 : i32
    %c0_i32_1 = arith.constant 0 : i32
    return %c0_i32, %c0_i32_0 : i32, i32
  }
  func.func @transform_3(%arg0: i32) -> (i32, i32) {
    %c0_i32 = arith.constant 0 : i32
    %c0_i32_0 = arith.constant 0 : i32
    %c0_i32_1 = arith.constant 0 : i32
    return %c0_i32, %c0_i32_0 : i32, i32
  }
  func.func @transform_4(%arg0: i32) -> (i32, i32) {
    %c0_i32 = arith.constant 0 : i32
    %c0_i32_0 = arith.constant 0 : i32
    return %arg0, %c0_i32 : i32, i32
  }
}

</mosaic_0001>

<llo_original>
// kernel: tpu_custom_call.1
$region0: #{tpu_custom_call.1}
  #allocation0 [shape = 'u32[]', space=smem, size = 0x4, offset = 0x4, fixed_abs, tag = 'smem constant byte address 0x4 - core index']
  #allocation1 [shape = 'u32[72,128]{1,0:T(1,128)}', space=vmem, size = 0x9000, scoped, tag = 'internal scratch']
  %s0 = inlined_call_operand.vmem [shape: f32[256,144], index: 0, kind: input, shape index: {}]
  %s1 = inlined_call_operand.vmem [shape: f32[144,512], index: 1, kind: input, shape index: {}]
  %s2 = inlined_call_operand.vmem [shape: f32[128,128], index: 2, kind: input, shape index: {}]
  %s3 = inlined_call_operand.vmem [shape: f32[1,512], index: 3, kind: input, shape index: {}]
  %s4 = inlined_call_operand.hbm [shape: f32[256,128], index: 4, kind: output, shape index: {}]
  %s5 = sld [smem:[#allocation0]]
  $region49: #{tpu_custom_call.1} parent=0
    _
  %s7 = ssub.s32 1, %s5
  %s8 = scalar_select 0, %s7, %s5
  $region1: #{tpu_custom_call.1} parent=0
    #allocation2 [shape = 'u8[65536]{0}', space=vmem, size = 0x10000, scoped, tag = 'output window, operand 0']
    #allocation3 [shape = 's32[2]{0}', space=sflag, size = 0x8, scoped, tag = 'scoped memory for tpu_custom_call.1']
    %9 = vsyncpa [#allocation3], 0
    %s10 = scalar_lea.sflag [#allocation3], 1
    %11 = vsyncpa %s10, 0
    loop: start=0, step=1, limit=6
    $region2: #{tpu_custom_call.1} parent=1 // loop_pre_header
      _
    $region3: #{tpu_custom_call.1} parent=1 // loop_header
      %s13 = sphi 0, %s17
      %p14 = scmp.ge.s32.totalorder %s13, 6
      %s23 = sphi 0, %s25
      %s26 = sphi 0, %s23
      %s27 = sphi 0, %s26
      %s43 = sphi 0, %s27
      %s47 = sphi 0, %s47
      %s49 = sphi 0, %s47
      %s50 = sphi 0, %s49
      %s64 = sphi 0, %s50
      %s68 = sphi 0, %s68
      %s70 = sphi 0, %s68
      %s71 = sphi 0, %s70
      %s85 = sphi 0, %s71
      %s89 = sphi 0, %s89
      %s91 = sphi 0, %s89
      %s92 = sphi 0, %s91
      %s106 = sphi 0, %s92
      %s112 = sphi 0, %s114
      %s115 = sphi 0, %s112
      %s116 = sphi 0, %s115
      %s132 = sphi 0, %s116
    $region4: #{tpu_custom_call.1} parent=1 // loop_header_branch
      %16 = sbr.rel (%p14) target = $region8
    $region5: #{tpu_custom_call.1} parent=1 // loop_body
      %s18 = ssub.s32 %s13, 1
      %s19 = ssub.s32 %s13, 2
      %s20 = sadd.s32 %s13, 1
      %s21 = ssub.s32 %s13, %s20
      %p22 = scmp.eq.s32.totalorder %s21, 0
      %s24 = sadd.s32 %s23, 1
      %s25 = scalar_select %p22, %s23, %s24
      %p28 = pneg %p22
      %p29 = scmp.eq.s32.totalorder %s13, 3
      %p30 = por %p28, %p29
      %p31 = scmp.ne.s32.totalorder %s23, %s26
      %p32 = scmp.eq.s32.totalorder %s13, 0
      %p33 = por %p31, %p32
      %p34 = scmp.ne.s32.totalorder %s23, %s26
      %p35 = scmp.eq.s32.totalorder %s18, 3
      %p36 = por %p34, %p35
      %p37 = scmp.ne.s32.totalorder %s26, %s27
      %p38 = scmp.eq.s32.totalorder %s18, 0
      %p39 = por %p37, %p38
      %p40 = scmp.ne.s32.totalorder %s26, %s27
      %p41 = scmp.eq.s32.totalorder %s19, 3
      %p42 = por %p40, %p41
      %p44 = scmp.ne.s32.totalorder %s27, %s43
      %p45 = scmp.eq.s32.totalorder %s19, 0
      %p46 = por %p44, %p45
      %s48 = sadd.s32 %s47, 1
      %p51 = scmp.eq.s32.totalorder %s13, 3
      %p52 = scmp.ne.s32.totalorder %s47, %s49
      %p53 = scmp.eq.s32.totalorder %s13, 0
      %p54 = por %p52, %p53
      %p55 = scmp.ne.s32.totalorder %s47, %s49
      %p56 = scmp.eq.s32.totalorder %s18, 3
      %p57 = por %p55, %p56
      %p58 = scmp.ne.s32.totalorder %s49, %s50
      %p59 = scmp.eq.s32.totalorder %s18, 0
      %p60 = por %p58, %p59
      %p61 = scmp.ne.s32.totalorder %s49, %s50
      %p62 = scmp.eq.s32.totalorder %s19, 3
      %p63 = por %p61, %p62
      %p65 = scmp.ne.s32.totalorder %s50, %s64
      %p66 = scmp.eq.s32.totalorder %s19, 0
      %p67 = por %p65, %p66
      %s69 = sadd.s32 %s68, 1
      %p72 = scmp.eq.s32.totalorder %s13, 3
      %p73 = scmp.ne.s32.totalorder %s68, %s70
      %p74 = scmp.eq.s32.totalorder %s13, 0
      %p75 = por %p73, %p74
      %p76 = scmp.ne.s32.totalorder %s68, %s70
      %p77 = scmp.eq.s32.totalorder %s18, 3
      %p78 = por %p76, %p77
      %p79 = scmp.ne.s32.totalorder %s70, %s71
      %p80 = scmp.eq.s32.totalorder %s18, 0
      %p81 = por %p79, %p80
      %p82 = scmp.ne.s32.totalorder %s70, %s71
      %p83 = scmp.eq.s32.totalorder %s19, 3
      %p84 = por %p82, %p83
      %p86 = scmp.ne.s32.totalorder %s71, %s85
      %p87 = scmp.eq.s32.totalorder %s19, 0
      %p88 = por %p86, %p87
      %s90 = sadd.s32 %s89, 1
      %p93 = scmp.eq.s32.totalorder %s13, 3
      %p94 = scmp.ne.s32.totalorder %s89, %s91
      %p95 = scmp.eq.s32.totalorder %s13, 0
      %p96 = por %p94, %p95
      %p97 = scmp.ne.s32.totalorder %s89, %s91
      %p98 = scmp.eq.s32.totalorder %s18, 3
      %p99 = por %p97, %p98
      %p100 = scmp.ne.s32.totalorder %s91, %s92
      %p101 = scmp.eq.s32.totalorder %s18, 0
      %p102 = por %p100, %p101
      %p103 = scmp.ne.s32.totalorder %s91, %s92
      %p104 = scmp.eq.s32.totalorder %s19, 3
      %p105 = por %p103, %p104
      %p107 = scmp.ne.s32.totalorder %s92, %s106
      %p108 = scmp.eq.s32.totalorder %s19, 0
      %p109 = por %p107, %p108
      %s110 = ssub.s32 %s13, %s20
      %p111 = scmp.eq.s32.totalorder %s110, 0
      %s113 = sadd.s32 %s112, 1
      %s114 = scalar_select %p111, %s112, %s113
      %p117 = pneg %p111
      %p118 = scmp.eq.s32.totalorder %s13, 3
      %p119 = por %p117, %p118
      %p120 = scmp.ne.s32.totalorder %s112, %s115
      %p121 = scmp.eq.s32.totalorder %s13, 0
      %p122 = por %p120, %p121
      %p123 = scmp.ne.s32.totalorder %s112, %s115
      %p124 = scmp.eq.s32.totalorder %s18, 3
      %p125 = por %p123, %p124
      %p126 = scmp.ne.s32.totalorder %s115, %s116
      %p127 = scmp.eq.s32.totalorder %s18, 0
      %p128 = por %p126, %p127
      %p129 = scmp.ne.s32.totalorder %s115, %s116
      %p130 = scmp.eq.s32.totalorder %s19, 3
      %p131 = por %p129, %p130
      %p133 = scmp.ne.s32.totalorder %s116, %s132
      %p134 = scmp.eq.s32.totalorder %s19, 0
      %p135 = por %p133, %p134
      %p136 = scmp.le.s32.totalorder 1, %s13
      %p137 = scmp.lt.s32.totalorder %s13, 5
      %p138 = pnand %p136, %p137
      %p139 = pneg %p138
      // Predicated region
      $region9: #{tpu_custom_call.1} parent=5 // pred_check
        _
      $region10: #{tpu_custom_call.1} parent=5 // pred_check_branch
        %141 = sbr.rel (%p138) target = $region12
      $region11: #{tpu_custom_call.1} parent=5 // pred_region
        %s142 = ssub.s32 %s13, 1
        // Predicated region
        $region13: #{tpu_custom_call.1} parent=11 // pred_check
          %p143 = pneg %p60
        $region14: #{tpu_custom_call.1} parent=11 // pred_check_branch
          %145 = sbr.rel (%p143) target = $region16
        $region15: #{tpu_custom_call.1} parent=11 // pred_region
          _
        $region16: #{tpu_custom_call.1} parent=11 // pred_fallthru
          _
        // Predicated region
        $region17: #{tpu_custom_call.1} parent=11 // pred_check
          %p146 = pneg %p81
        $region18: #{tpu_custom_call.1} parent=11 // pred_check_branch
          %148 = sbr.rel (%p146) target = $region20
        $region19: #{tpu_custom_call.1} parent=11 // pred_region
          _
        $region20: #{tpu_custom_call.1} parent=11 // pred_fallthru
          _
        // Predicated region
        $region21: #{tpu_custom_call.1} parent=11 // pred_check
          %p149 = pneg %p102
        $region22: #{tpu_custom_call.1} parent=11 // pred_check_branch
          %151 = sbr.rel (%p149) target = $region24
        $region23: #{tpu_custom_call.1} parent=11 // pred_region
          _
        $region24: #{tpu_custom_call.1} parent=11 // pred_fallthru
          _
      $region12: #{tpu_custom_call.1} parent=5 // pred_fallthru
        _
      %p152 = scmp.lt.s32.totalorder %s13, 4
      // Predicated region
      $region25: #{tpu_custom_call.1} parent=5 // pred_check
        %p153 = pneg %p152
      $region26: #{tpu_custom_call.1} parent=5 // pred_check_branch
        %155 = sbr.rel (%p153) target = $region28
      $region27: #{tpu_custom_call.1} parent=5 // pred_region
        // Predicated region
        $region29: #{tpu_custom_call.1} parent=27 // pred_check
          %p156 = pneg %p33
        $region30: #{tpu_custom_call.1} parent=27 // pred_check_branch
          %158 = sbr.rel (%p156) target = $region32
        $region31: #{tpu_custom_call.1} parent=27 // pred_region
          %s159 = smul.u32 8, %s13
          %p160 = scmp.lt.s32.totalorder %s159, 31
          %s161 = scalar_select %p160, %s159, 31
          %s162 = smul.addr %s161, 2
          %s163 = smul.addr %s162, 8
          %s164 = scalar_lea.vmem %s0, %s163
          %s165 = smul.u32 8, %s13
        $region32: #{tpu_custom_call.1} parent=27 // pred_fallthru
          _
      $region28: #{tpu_custom_call.1} parent=5 // pred_fallthru
        _
      %p166 = scmp.le.s32.totalorder 1, %s13
      %p167 = scmp.lt.s32.totalorder %s13, 5
      %p168 = pnand %p166, %p167
      %p169 = pneg %p168
      // Predicated region
      $region33: #{tpu_custom_call.1} parent=5 // pred_check
        _
      $region34: #{tpu_custom_call.1} parent=5 // pred_check_branch
        %171 = sbr.rel (%p168) target = $region36
      $region35: #{tpu_custom_call.1} parent=5 // pred_region
        %s172 = ssub.s32 %s13, 1
        %s173 = smul.u32 8, %s18
        %p174 = scmp.lt.s32.totalorder %s173, 31
        %s175 = scalar_select %p174, %s173, 31
        %s176 = smul.addr %s175, 2
        %s177 = smul.addr %s176, 8
        %s178 = scalar_lea.vmem %s0, %s177
        %p179 = pneg %p39
        %p180 = pneg %p36
        %p181 = pneg %p60
        %p182 = pneg %p57
        %p183 = pneg %p81
        %p184 = pneg %p78
        %p185 = pneg %p102
        %p186 = pneg %p99
        %p187 = pneg %p128
        %p188 = pneg %p125
        %s189 = sand.u32 %s115, 1
        %s190 = scalar_lea.sflag [#allocation3], %s189
        %s191 = sand.u32 %s115, 1
        %s192 = smul.addr %s191, 64
        %s193 = scalar_lea.vmem [#allocation2], %s192
        %s194 = smul.u32 8, %s18
        %p195 = scmp.lt.s32.totalorder %s194, 31
        %s196 = scalar_select %p195, %s194, 31
        %s197 = smul.addr %s196, 2
        %s198 = smul.addr %s197, 8
        %s199 = scalar_lea.vmem %s0, %s198
        %s200 = smul.u32 8, %s18
        %s201 = smul.u32 8, %s18
        %v202 = vld [vmem:[%s1] sm:$0xff]
        %v203 = vld [vmem:[%s1 + $0x8] sm:$0xff]
        %v204 = vld [vmem:[%s1 + $0x10] sm:$0xff]
        %v205 = vld [vmem:[%s1 + $0x18] sm:$0xff]
        %v206 = vld [vmem:[%s1 + $0x20] sm:$0xff]
        %v207 = vld [vmem:[%s1 + $0x28] sm:$0xff]
        %v208 = vld [vmem:[%s1 + $0x30] sm:$0xff]
        %v209 = vld [vmem:[%s1 + $0x38] sm:$0xff]
        %v210 = vld [vmem:[%s1 + $0x40] sm:$0xff]
        %v211 = vld [vmem:[%s1 + $0x48] sm:$0xff]
        %v212 = vld [vmem:[%s1 + $0x50] sm:$0xff]
        %v213 = vld [vmem:[%s1 + $0x58] sm:$0xff]
        %v214 = vld [vmem:[%s1 + $0x60] sm:$0xff]
        %v215 = vld [vmem:[%s1 + $0x68] sm:$0xff]
        %v216 = vld [vmem:[%s1 + $0x70] sm:$0xff]
        %v217 = vld [vmem:[%s1 + $0x78] sm:$0xff]
        %v218 = vld [vmem:[%s1 + $0x80] sm:$0xff]
        %v219 = vld [vmem:[%s1 + $0x88] sm:$0xff]
        %v220 = vld [vmem:[%s1 + $0x90] sm:$0xff]
        %v221 = vld [vmem:[%s1 + $0x98] sm:$0xff]
        %v222 = vld [vmem:[%s1 + $0xa0] sm:$0xff]
        %v223 = vld [vmem:[%s1 + $0xa8] sm:$0xff]
        %v224 = vld [vmem:[%s1 + $0xb0] sm:$0xff]
        %v225 = vld [vmem:[%s1 + $0xb8] sm:$0xff]
        %v226 = vld [vmem:[%s1 + $0xc0] sm:$0xff]
        %v227 = vld [vmem:[%s1 + $0xc8] sm:$0xff]
        %v228 = vld [vmem:[%s1 + $0xd0] sm:$0xff]
        %v229 = vld [vmem:[%s1 + $0xd8] sm:$0xff]
        %v230 = vld [vmem:[%s1 + $0xe0] sm:$0xff]
        %v231 = vld [vmem:[%s1 + $0xe8] sm:$0xff]
        %v232 = vld [vmem:[%s1 + $0xf0] sm:$0xff]
        %v233 = vld [vmem:[%s1 + $0xf8] sm:$0xff]
        %v234 = vld [vmem:[%s1 + $0x100] sm:$0xff]
        %v235 = vld [vmem:[%s1 + $0x108] sm:$0xff]
        %v236 = vld [vmem:[%s1 + $0x110] sm:$0xff]
        %v237 = vld [vmem:[%s1 + $0x118] sm:$0xff]
        %v238 = vld [vmem:[%s1 + $0x120] sm:$0xff]
        %v239 = vld [vmem:[%s1 + $0x128] sm:$0xff]
        %v240 = vld [vmem:[%s1 + $0x130] sm:$0xff]
        %v241 = vld [vmem:[%s1 + $0x138] sm:$0xff]
        %v242 = vld [vmem:[%s1 + $0x140] sm:$0xff]
        %v243 = vld [vmem:[%s1 + $0x148] sm:$0xff]
        %v244 = vld [vmem:[%s1 + $0x150] sm:$0xff]
        %v245 = vld [vmem:[%s1 + $0x158] sm:$0xff]
        %v246 = vld [vmem:[%s1 + $0x160] sm:$0xff]
        %v247 = vld [vmem:[%s1 + $0x168] sm:$0xff]
        %v248 = vld [vmem:[%s1 + $0x170] sm:$0xff]
        %v249 = vld [vmem:[%s1 + $0x178] sm:$0xff]
        %v250 = vld [vmem:[%s1 + $0x180] sm:$0xff]
        %v251 = vld [vmem:[%s1 + $0x188] sm:$0xff]
        %v252 = vld [vmem:[%s1 + $0x190] sm:$0xff]
        %v253 = vld [vmem:[%s1 + $0x198] sm:$0xff]
        %v254 = vld [vmem:[%s1 + $0x1a0] sm:$0xff]
        %v255 = vld [vmem:[%s1 + $0x1a8] sm:$0xff]
        %v256 = vld [vmem:[%s1 + $0x1b0] sm:$0xff]
        %v257 = vld [vmem:[%s1 + $0x1b8] sm:$0xff]
        %v258 = vld [vmem:[%s1 + $0x1c0] sm:$0xff]
        %v259 = vld [vmem:[%s1 + $0x1c8] sm:$0xff]
        %v260 = vld [vmem:[%s1 + $0x1d0] sm:$0xff]
        %v261 = vld [vmem:[%s1 + $0x1d8] sm:$0xff]
        %v262 = vld [vmem:[%s1 + $0x1e0] sm:$0xff]
        %v263 = vld [vmem:[%s1 + $0x1e8] sm:$0xff]
        %v264 = vld [vmem:[%s1 + $0x1f0] sm:$0xff]
        %v265 = vld [vmem:[%s1 + $0x1f8] sm:$0xff]
        %v266 = vld [vmem:[%s1 + $0x200] sm:$0xff]
        %v267 = vld [vmem:[%s1 + $0x208] sm:$0xff]
        %v268 = vld [vmem:[%s1 + $0x210] sm:$0xff]
        %v269 = vld [vmem:[%s1 + $0x218] sm:$0xff]
        %v270 = vld [vmem:[%s1 + $0x220] sm:$0xff]
        %v271 = vld [vmem:[%s1 + $0x228] sm:$0xff]
        %v272 = vld [vmem:[%s1 + $0x230] sm:$0xff]
        %v273 = vld [vmem:[%s1 + $0x238] sm:$0xff]
        %v274 = vld [vmem:[%s199] sm:$0xff]
        %v275 = vld [vmem:[%s199 + $0x8] sm:$0xff]
        %v276 = vld [vmem:[%s199 + $0x10] sm:$0xff]
        %v277 = vld [vmem:[%s199 + $0x18] sm:$0xff]
        %v278 = vld [vmem:[%s199 + $0x20] sm:$0xff]
        %v279 = vld [vmem:[%s199 + $0x28] sm:$0xff]
        %v280 = vld [vmem:[%s199 + $0x30] sm:$0xff]
        %v281 = vld [vmem:[%s199 + $0x38] sm:$0xff]
        %v282 = vld [vmem:[%s199 + $0x40] sm:$0xff]
        %v283 = vld [vmem:[%s199 + $0x48] sm:$0xff]
        %v284 = vld [vmem:[%s199 + $0x50] sm:$0xff]
        %v285 = vld [vmem:[%s199 + $0x58] sm:$0xff]
        %v286 = vld [vmem:[%s199 + $0x60] sm:$0xff]
        %v287 = vld [vmem:[%s199 + $0x68] sm:$0xff]
        %v288 = vld [vmem:[%s199 + $0x70] sm:$0xff]
        %v289 = vld [vmem:[%s199 + $0x78] sm:$0xff]
        %v290 = vld [vmem:[%s3] sm:$0xf]
        %v292 = vperm.slane %v290, 0
        %v293 = vperm.slane %v290, 1
        %v294 = vperm.slane %v290, 2
        %v295 = vperm.slane %v290, 3
        %vm300 = vcmask 130048
        %v302 = vsel %vm300, %v275, 0
        %v305 = vsel %vm300, %v277, 0
        %v308 = vsel %vm300, %v279, 0
        %v311 = vsel %vm300, %v281, 0
        %v314 = vsel %vm300, %v283, 0
        %v317 = vsel %vm300, %v285, 0
        %v320 = vsel %vm300, %v287, 0
        %v323 = vsel %vm300, %v289, 0
        %325 = vmatpush.msra.mxu0 %v262
        %326 = vmatpush.msra.mxu0 %v258
        %327 = vmatpush.msra.mxu0 %v254
        %328 = vmatpush.msra.mxu0 %v250
        %329 = vmatpush.msra.mxu0 %v246
        %330 = vmatpush.msra.mxu0 %v242
        %331 = vmatpush.msra.mxu0 %v238
        %332 = vmatpush.msra.mxu0 %v234
        %333 = vmatpush.msra.mxu0 %v230
        %334 = vmatpush.msra.mxu0 %v226
        %335 = vmatpush.msra.mxu0 %v222
        %336 = vmatpush.msra.mxu0 %v218
        %337 = vmatpush.msra.mxu0 %v214
        %338 = vmatpush.msra.mxu0 %v210
        %339 = vmatpush.msra.mxu0 %v206
        %340 = vmatpush.msra.mxu0 %v202
        %341 = vmatmul.f32.gmra.mxu0 %v274
        %v342 = vpop.f32.mrf.mxu0
        %v343 = vadd.f32 %v292, %v342
        %344 = vmatmul.f32.gmra.mxu0 %v276
        %v345 = vpop.f32.mrf.mxu0
        %v346 = vadd.f32 %v292, %v345
        %347 = vmatmul.f32.gmra.mxu0 %v278
        %v348 = vpop.f32.mrf.mxu0
        %v349 = vadd.f32 %v292, %v348
        %350 = vmatmul.f32.gmra.mxu0 %v280
        %v351 = vpop.f32.mrf.mxu0
        %v352 = vadd.f32 %v292, %v351
        %353 = vmatmul.f32.gmra.mxu0 %v282
        %v354 = vpop.f32.mrf.mxu0
        %v355 = vadd.f32 %v292, %v354
        %356 = vmatmul.f32.gmra.mxu0 %v284
        %v357 = vpop.f32.mrf.mxu0
        %v358 = vadd.f32 %v292, %v357
        %359 = vmatmul.f32.gmra.mxu0 %v286
        %v360 = vpop.f32.mrf.mxu0
        %v361 = vadd.f32 %v292, %v360
        %362 = vmatmul.f32.gmra.mxu0 %v288
        %v363 = vpop.f32.mrf.mxu0
        %v364 = vadd.f32 %v292, %v363
        %365 = vdwg.mxu0
        %366 = vmatpush.msra.mxu0 0.0
        %367 = vmatpush.msra.mxu0 0.0
        %368 = vmatpush.msra.mxu0 0.0
        %369 = vmatpush.msra.mxu0 0.0
        %370 = vmatpush.msra.mxu0 0.0
        %371 = vmatpush.msra.mxu0 0.0
        %372 = vmatpush.msra.mxu0 0.0
        %373 = vmatpush.msra.mxu0 0.0
        %374 = vmatpush.msra.mxu0 0.0
        %375 = vmatpush.msra.mxu0 0.0
        %376 = vmatpush.msra.mxu0 0.0
        %377 = vmatpush.msra.mxu0 0.0
        %378 = vmatpush.msra.mxu0 0.0
        %379 = vmatpush.msra.mxu0 0.0
        %380 = vmatpush.msra.mxu0 %v270
        %381 = vmatpush.msra.mxu0 %v266
        %382 = vmatmul.f32.gmra.mxu0 %v302
        %v383 = vpop.f32.mrf.mxu0
        %v384 = vadd.f32 %v343, %v383
        %385 = vmatmul.f32.gmra.mxu0 %v305
        %v386 = vpop.f32.mrf.mxu0
        %v387 = vadd.f32 %v346, %v386
        %388 = vmatmul.f32.gmra.mxu0 %v308
        %v389 = vpop.f32.mrf.mxu0
        %v390 = vadd.f32 %v349, %v389
        %391 = vmatmul.f32.gmra.mxu0 %v311
        %v392 = vpop.f32.mrf.mxu0
        %v393 = vadd.f32 %v352, %v392
        %394 = vmatmul.f32.gmra.mxu0 %v314
        %v395 = vpop.f32.mrf.mxu0
        %v396 = vadd.f32 %v355, %v395
        %397 = vmatmul.f32.gmra.mxu0 %v317
        %v398 = vpop.f32.mrf.mxu0
        %v399 = vadd.f32 %v358, %v398
        %400 = vmatmul.f32.gmra.mxu0 %v320
        %v401 = vpop.f32.mrf.mxu0
        %v402 = vadd.f32 %v361, %v401
        %403 = vmatmul.f32.gmra.mxu0 %v323
        %v404 = vpop.f32.mrf.mxu0
        %v405 = vadd.f32 %v364, %v404
        %406 = vdwg.mxu0
        %407 = vmatpush.msra.mxu0 %v263
        %408 = vmatpush.msra.mxu0 %v259
        %409 = vmatpush.msra.mxu0 %v255
        %410 = vmatpush.msra.mxu0 %v251
        %411 = vmatpush.msra.mxu0 %v247
        %412 = vmatpush.msra.mxu0 %v243
        %413 = vmatpush.msra.mxu0 %v239
        %414 = vmatpush.msra.mxu0 %v235
        %415 = vmatpush.msra.mxu0 %v231
        %416 = vmatpush.msra.mxu0 %v227
        %417 = vmatpush.msra.mxu0 %v223
        %418 = vmatpush.msra.mxu0 %v219
        %419 = vmatpush.msra.mxu0 %v215
        %420 = vmatpush.msra.mxu0 %v211
        %421 = vmatpush.msra.mxu0 %v207
        %422 = vmatpush.msra.mxu0 %v203
        %423 = vmatmul.f32.gmra.mxu0 %v274
        %v424 = vpop.f32.mrf.mxu0
        %v425 = vadd.f32 %v293, %v424
        %426 = vmatmul.f32.gmra.mxu0 %v276
        %v427 = vpop.f32.mrf.mxu0
        %v428 = vadd.f32 %v293, %v427
        %429 = vmatmul.f32.gmra.mxu0 %v278
        %v430 = vpop.f32.mrf.mxu0
        %v431 = vadd.f32 %v293, %v430
        %432 = vmatmul.f32.gmra.mxu0 %v280
        %v433 = vpop.f32.mrf.mxu0
        %v434 = vadd.f32 %v293, %v433
        %435 = vmatmul.f32.gmra.mxu0 %v282
        %v436 = vpop.f32.mrf.mxu0
        %v437 = vadd.f32 %v293, %v436
        %438 = vmatmul.f32.gmra.mxu0 %v284
        %v439 = vpop.f32.mrf.mxu0
        %v440 = vadd.f32 %v293, %v439
        %441 = vmatmul.f32.gmra.mxu0 %v286
        %v442 = vpop.f32.mrf.mxu0
        %v443 = vadd.f32 %v293, %v442
        %444 = vmatmul.f32.gmra.mxu0 %v288
        %v445 = vpop.f32.mrf.mxu0
        %v446 = vadd.f32 %v293, %v445
        %447 = vdwg.mxu0
        %448 = vmatpush.msra.mxu0 0.0
        %449 = vmatpush.msra.mxu0 0.0
        %450 = vmatpush.msra.mxu0 0.0
        %451 = vmatpush.msra.mxu0 0.0
        %452 = vmatpush.msra.mxu0 0.0
        %453 = vmatpush.msra.mxu0 0.0
        %454 = vmatpush.msra.mxu0 0.0
        %455 = vmatpush.msra.mxu0 0.0
        %456 = vmatpush.msra.mxu0 0.0
        %457 = vmatpush.msra.mxu0 0.0
        %458 = vmatpush.msra.mxu0 0.0
        %459 = vmatpush.msra.mxu0 0.0
        %460 = vmatpush.msra.mxu0 0.0
        %461 = vmatpush.msra.mxu0 0.0
        %462 = vmatpush.msra.mxu0 %v271
        %463 = vmatpush.msra.mxu0 %v267
        %464 = vmatmul.f32.gmra.mxu0 %v302
        %v465 = vpop.f32.mrf.mxu0
        %v466 = vadd.f32 %v425, %v465
        %467 = vmatmul.f32.gmra.mxu0 %v305
        %v468 = vpop.f32.mrf.mxu0
        %v469 = vadd.f32 %v428, %v468
        %470 = vmatmul.f32.gmra.mxu0 %v308
        %v471 = vpop.f32.mrf.mxu0
        %v472 = vadd.f32 %v431, %v471
        %473 = vmatmul.f32.gmra.mxu0 %v311
        %v474 = vpop.f32.mrf.mxu0
        %v475 = vadd.f32 %v434, %v474
        %476 = vmatmul.f32.gmra.mxu0 %v314
        %v477 = vpop.f32.mrf.mxu0
        %v478 = vadd.f32 %v437, %v477
        %479 = vmatmul.f32.gmra.mxu0 %v317
        %v480 = vpop.f32.mrf.mxu0
        %v481 = vadd.f32 %v440, %v480
        %482 = vmatmul.f32.gmra.mxu0 %v320
        %v483 = vpop.f32.mrf.mxu0
        %v484 = vadd.f32 %v443, %v483
        %485 = vmatmul.f32.gmra.mxu0 %v323
        %v486 = vpop.f32.mrf.mxu0
        %v487 = vadd.f32 %v446, %v486
        %488 = vdwg.mxu0
        %489 = vmatpush.msra.mxu0 %v264
        %490 = vmatpush.msra.mxu0 %v260
        %491 = vmatpush.msra.mxu0 %v256
        %492 = vmatpush.msra.mxu0 %v252
        %493 = vmatpush.msra.mxu0 %v248
        %494 = vmatpush.msra.mxu0 %v244
        %495 = vmatpush.msra.mxu0 %v240
        %496 = vmatpush.msra.mxu0 %v236
        %497 = vmatpush.msra.mxu0 %v232
        %498 = vmatpush.msra.mxu0 %v228
        %499 = vmatpush.msra.mxu0 %v224
        %500 = vmatpush.msra.mxu0 %v220
        %501 = vmatpush.msra.mxu0 %v216
        %502 = vmatpush.msra.mxu0 %v212
        %503 = vmatpush.msra.mxu0 %v208
        %504 = vmatpush.msra.mxu0 %v204
        %505 = vmatmul.f32.gmra.mxu0 %v274
        %v506 = vpop.f32.mrf.mxu0
        %v507 = vadd.f32 %v294, %v506
        %508 = vmatmul.f32.gmra.mxu0 %v276
        %v509 = vpop.f32.mrf.mxu0
        %v510 = vadd.f32 %v294, %v509
        %511 = vmatmul.f32.gmra.mxu0 %v278
        %v512 = vpop.f32.mrf.mxu0
        %v513 = vadd.f32 %v294, %v512
        %514 = vmatmul.f32.gmra.mxu0 %v280
        %v515 = vpop.f32.mrf.mxu0
        %v516 = vadd.f32 %v294, %v515
        %517 = vmatmul.f32.gmra.mxu0 %v282
        %v518 = vpop.f32.mrf.mxu0
        %v519 = vadd.f32 %v294, %v518
        %520 = vmatmul.f32.gmra.mxu0 %v284
        %v521 = vpop.f32.mrf.mxu0
        %v522 = vadd.f32 %v294, %v521
        %523 = vmatmul.f32.gmra.mxu0 %v286
        %v524 = vpop.f32.mrf.mxu0
        %v525 = vadd.f32 %v294, %v524
        %526 = vmatmul.f32.gmra.mxu0 %v288
        %v527 = vpop.f32.mrf.mxu0
        %v528 = vadd.f32 %v294, %v527
        %529 = vdwg.mxu0
        %530 = vmatpush.msra.mxu0 0.0
        %531 = vmatpush.msra.mxu0 0.0
        %532 = vmatpush.msra.mxu0 0.0
        %533 = vmatpush.msra.mxu0 0.0
        %534 = vmatpush.msra.mxu0 0.0
        %535 = vmatpush.msra.mxu0 0.0
        %536 = vmatpush.msra.mxu0 0.0
        %537 = vmatpush.msra.mxu0 0.0
        %538 = vmatpush.msra.mxu0 0.0
        %539 = vmatpush.msra.mxu0 0.0
        %540 = vmatpush.msra.mxu0 0.0
        %541 = vmatpush.msra.mxu0 0.0
        %542 = vmatpush.msra.mxu0 0.0
        %543 = vmatpush.msra.mxu0 0.0
        %544 = vmatpush.msra.mxu0 %v272
        %545 = vmatpush.msra.mxu0 %v268
        %546 = vmatmul.f32.gmra.mxu0 %v302
        %v547 = vpop.f32.mrf.mxu0
        %v548 = vadd.f32 %v507, %v547
        %549 = vmatmul.f32.gmra.mxu0 %v305
        %v550 = vpop.f32.mrf.mxu0
        %v551 = vadd.f32 %v510, %v550
        %552 = vmatmul.f32.gmra.mxu0 %v308
        %v553 = vpop.f32.mrf.mxu0
        %v554 = vadd.f32 %v513, %v553
        %555 = vmatmul.f32.gmra.mxu0 %v311
        %v556 = vpop.f32.mrf.mxu0
        %v557 = vadd.f32 %v516, %v556
        %558 = vmatmul.f32.gmra.mxu0 %v314
        %v559 = vpop.f32.mrf.mxu0
        %v560 = vadd.f32 %v519, %v559
        %561 = vmatmul.f32.gmra.mxu0 %v317
        %v562 = vpop.f32.mrf.mxu0
        %v563 = vadd.f32 %v522, %v562
        %564 = vmatmul.f32.gmra.mxu0 %v320
        %v565 = vpop.f32.mrf.mxu0
        %v566 = vadd.f32 %v525, %v565
        %567 = vmatmul.f32.gmra.mxu0 %v323
        %v568 = vpop.f32.mrf.mxu0
        %v569 = vadd.f32 %v528, %v568
        %570 = vdwg.mxu0
        %571 = vmatpush.msra.mxu0 %v265
        %572 = vmatpush.msra.mxu0 %v261
        %573 = vmatpush.msra.mxu0 %v257
        %574 = vmatpush.msra.mxu0 %v253
        %575 = vmatpush.msra.mxu0 %v249
        %576 = vmatpush.msra.mxu0 %v245
        %577 = vmatpush.msra.mxu0 %v241
        %578 = vmatpush.msra.mxu0 %v237
        %579 = vmatpush.msra.mxu0 %v233
        %580 = vmatpush.msra.mxu0 %v229
        %581 = vmatpush.msra.mxu0 %v225
        %582 = vmatpush.msra.mxu0 %v221
        %583 = vmatpush.msra.mxu0 %v217
        %584 = vmatpush.msra.mxu0 %v213
        %585 = vmatpush.msra.mxu0 %v209
        %586 = vmatpush.msra.mxu0 %v205
        %587 = vmatmul.f32.gmra.mxu0 %v274
        %v588 = vpop.f32.mrf.mxu0
        %v589 = vadd.f32 %v295, %v588
        %590 = vmatmul.f32.gmra.mxu0 %v276
        %v591 = vpop.f32.mrf.mxu0
        %v592 = vadd.f32 %v295, %v591
        %593 = vmatmul.f32.gmra.mxu0 %v278
        %v594 = vpop.f32.mrf.mxu0
        %v595 = vadd.f32 %v295, %v594
        %596 = vmatmul.f32.gmra.mxu0 %v280
        %v597 = vpop.f32.mrf.mxu0
        %v598 = vadd.f32 %v295, %v597
        %599 = vmatmul.f32.gmra.mxu0 %v282
        %v600 = vpop.f32.mrf.mxu0
        %v601 = vadd.f32 %v295, %v600
        %602 = vmatmul.f32.gmra.mxu0 %v284
        %v603 = vpop.f32.mrf.mxu0
        %v604 = vadd.f32 %v295, %v603
        %605 = vmatmul.f32.gmra.mxu0 %v286
        %v606 = vpop.f32.mrf.mxu0
        %v607 = vadd.f32 %v295, %v606
        %608 = vmatmul.f32.gmra.mxu0 %v288
        %v609 = vpop.f32.mrf.mxu0
        %v610 = vadd.f32 %v295, %v609
        %611 = vdwg.mxu0
        %612 = vmatpush.msra.mxu0 0.0
        %613 = vmatpush.msra.mxu0 0.0
        %614 = vmatpush.msra.mxu0 0.0
        %615 = vmatpush.msra.mxu0 0.0
        %616 = vmatpush.msra.mxu0 0.0
        %617 = vmatpush.msra.mxu0 0.0
        %618 = vmatpush.msra.mxu0 0.0
        %619 = vmatpush.msra.mxu0 0.0
        %620 = vmatpush.msra.mxu0 0.0
        %621 = vmatpush.msra.mxu0 0.0
        %622 = vmatpush.msra.mxu0 0.0
        %623 = vmatpush.msra.mxu0 0.0
        %624 = vmatpush.msra.mxu0 0.0
        %625 = vmatpush.msra.mxu0 0.0
        %626 = vmatpush.msra.mxu0 %v273
        %627 = vmatpush.msra.mxu0 %v269
        %628 = vmatmul.f32.gmra.mxu0 %v302
        %v629 = vpop.f32.mrf.mxu0
        %v630 = vadd.f32 %v589, %v629
        %631 = vmatmul.f32.gmra.mxu0 %v305
        %v632 = vpop.f32.mrf.mxu0
        %v633 = vadd.f32 %v592, %v632
        %634 = vmatmul.f32.gmra.mxu0 %v308
        %v635 = vpop.f32.mrf.mxu0
        %v636 = vadd.f32 %v595, %v635
        %637 = vmatmul.f32.gmra.mxu0 %v311
        %v638 = vpop.f32.mrf.mxu0
        %v639 = vadd.f32 %v598, %v638
        %640 = vmatmul.f32.gmra.mxu0 %v314
        %v641 = vpop.f32.mrf.mxu0
        %v642 = vadd.f32 %v601, %v641
        %643 = vmatmul.f32.gmra.mxu0 %v317
        %v644 = vpop.f32.mrf.mxu0
        %v645 = vadd.f32 %v604, %v644
        %646 = vmatmul.f32.gmra.mxu0 %v320
        %v647 = vpop.f32.mrf.mxu0
        %v648 = vadd.f32 %v607, %v647
        %649 = vmatmul.f32.gmra.mxu0 %v323
        %v650 = vpop.f32.mrf.mxu0
        %v651 = vadd.f32 %v610, %v650
        %652 = vdwg.mxu0
        %v653 = vtanh.pop %v384
        %v654 = vtanh.pop %v387
        %v655 = vtanh.pop %v390
        %v656 = vtanh.pop %v393
        %v657 = vtanh.pop %v396
        %v658 = vtanh.pop %v399
        %v659 = vtanh.pop %v402
        %v660 = vtanh.pop %v405
        %v661 = vtanh.pop %v466
        %v662 = vtanh.pop %v469
        %v663 = vtanh.pop %v472
        %v664 = vtanh.pop %v475
        %v665 = vtanh.pop %v478
        %v666 = vtanh.pop %v481
        %v667 = vtanh.pop %v484
        %v668 = vtanh.pop %v487
        %v669 = vtanh.pop %v548
        %v670 = vtanh.pop %v551
        %v671 = vtanh.pop %v554
        %v672 = vtanh.pop %v557
        %v673 = vtanh.pop %v560
        %v674 = vtanh.pop %v563
        %v675 = vtanh.pop %v566
        %v676 = vtanh.pop %v569
        %v677 = vmul.f32 %v274, %v669
        %v678 = vmul.f32 %v276, %v670
        %v679 = vmul.f32 %v278, %v671
        %v680 = vmul.f32 %v280, %v672
        %v681 = vmul.f32 %v282, %v673
        %v682 = vmul.f32 %v284, %v674
        %v683 = vmul.f32 %v286, %v675
        %v684 = vmul.f32 %v288, %v676
        %v685 = vld [vmem:[%s2] sm:$0xff]
        %v686 = vld [vmem:[%s2 + $0x8] sm:$0xff]
        %v687 = vld [vmem:[%s2 + $0x10] sm:$0xff]
        %v688 = vld [vmem:[%s2 + $0x18] sm:$0xff]
        %v689 = vld [vmem:[%s2 + $0x20] sm:$0xff]
        %v690 = vld [vmem:[%s2 + $0x28] sm:$0xff]
        %v691 = vld [vmem:[%s2 + $0x30] sm:$0xff]
        %v692 = vld [vmem:[%s2 + $0x38] sm:$0xff]
        %v693 = vld [vmem:[%s2 + $0x40] sm:$0xff]
        %v694 = vld [vmem:[%s2 + $0x48] sm:$0xff]
        %v695 = vld [vmem:[%s2 + $0x50] sm:$0xff]
        %v696 = vld [vmem:[%s2 + $0x58] sm:$0xff]
        %v697 = vld [vmem:[%s2 + $0x60] sm:$0xff]
        %v698 = vld [vmem:[%s2 + $0x68] sm:$0xff]
        %v699 = vld [vmem:[%s2 + $0x70] sm:$0xff]
        %v700 = vld [vmem:[%s2 + $0x78] sm:$0xff]
        %701 = vmatpush.msra.mxu0 %v700
        %702 = vmatpush.msra.mxu0 %v699
        %703 = vmatpush.msra.mxu0 %v698
        %704 = vmatpush.msra.mxu0 %v697
        %705 = vmatpush.msra.mxu0 %v696
        %706 = vmatpush.msra.mxu0 %v695
        %707 = vmatpush.msra.mxu0 %v694
        %708 = vmatpush.msra.mxu0 %v693
        %709 = vmatpush.msra.mxu0 %v692
        %710 = vmatpush.msra.mxu0 %v691
        %711 = vmatpush.msra.mxu0 %v690
        %712 = vmatpush.msra.mxu0 %v689
        %713 = vmatpush.msra.mxu0 %v688
        %714 = vmatpush.msra.mxu0 %v687
        %715 = vmatpush.msra.mxu0 %v686
        %716 = vmatpush.msra.mxu0 %v685
        %717 = vmatmul.f32.gmra.mxu0 %v677
        %v718 = vpop.f32.mrf.mxu0
        %v719 = vadd.f32 0.0, %v718
        %720 = vmatmul.f32.gmra.mxu0 %v678
        %v721 = vpop.f32.mrf.mxu0
        %v722 = vadd.f32 0.0, %v721
        %723 = vmatmul.f32.gmra.mxu0 %v679
        %v724 = vpop.f32.mrf.mxu0
        %v725 = vadd.f32 0.0, %v724
        %726 = vmatmul.f32.gmra.mxu0 %v680
        %v727 = vpop.f32.mrf.mxu0
        %v728 = vadd.f32 0.0, %v727
        %729 = vmatmul.f32.gmra.mxu0 %v681
        %v730 = vpop.f32.mrf.mxu0
        %v731 = vadd.f32 0.0, %v730
        %732 = vmatmul.f32.gmra.mxu0 %v682
        %v733 = vpop.f32.mrf.mxu0
        %v734 = vadd.f32 0.0, %v733
        %735 = vmatmul.f32.gmra.mxu0 %v683
        %v736 = vpop.f32.mrf.mxu0
        %v737 = vadd.f32 0.0, %v736
        %738 = vmatmul.f32.gmra.mxu0 %v684
        %v739 = vpop.f32.mrf.mxu0
        %v740 = vadd.f32 0.0, %v739
        %741 = vdwg.mxu0
        %v742 = vadd.f32 %v630, %v719
        %v743 = vadd.f32 %v633, %v722
        %v744 = vadd.f32 %v636, %v725
        %v745 = vadd.f32 %v639, %v728
        %v746 = vadd.f32 %v642, %v731
        %v747 = vadd.f32 %v645, %v734
        %v748 = vadd.f32 %v648, %v737
        %v749 = vadd.f32 %v651, %v740
        %v750 = vtanh.pop %v742
        %v751 = vtanh.pop %v743
        %v752 = vtanh.pop %v744
        %v753 = vtanh.pop %v745
        %v754 = vtanh.pop %v746
        %v755 = vtanh.pop %v747
        %v756 = vtanh.pop %v748
        %v757 = vtanh.pop %v749
        %v758 = vsub.f32 1.0, %v661
        %v759 = vsub.f32 1.0, %v662
        %v760 = vsub.f32 1.0, %v663
        %v761 = vsub.f32 1.0, %v664
        %v762 = vsub.f32 1.0, %v665
        %v763 = vsub.f32 1.0, %v666
        %v764 = vsub.f32 1.0, %v667
        %v765 = vsub.f32 1.0, %v668
        %v766 = vmul.f32 %v758, %v750
        %v767 = vmul.f32 %v759, %v751
        %v768 = vmul.f32 %v760, %v752
        %v769 = vmul.f32 %v761, %v753
        %v770 = vmul.f32 %v762, %v754
        %v771 = vmul.f32 %v763, %v755
        %v772 = vmul.f32 %v764, %v756
        %v773 = vmul.f32 %v765, %v757
        %v774 = vmul.f32 %v653, %v274
        %v775 = vmul.f32 %v654, %v276
        %v776 = vmul.f32 %v655, %v278
        %v777 = vmul.f32 %v656, %v280
        %v778 = vmul.f32 %v657, %v282
        %v779 = vmul.f32 %v658, %v284
        %v780 = vmul.f32 %v659, %v286
        %v781 = vmul.f32 %v660, %v288
        %v782 = vadd.f32 %v766, %v774
        %v783 = vadd.f32 %v767, %v775
        %v784 = vadd.f32 %v768, %v776
        %v785 = vadd.f32 %v769, %v777
        %v786 = vadd.f32 %v770, %v778
        %v787 = vadd.f32 %v771, %v779
        %v788 = vadd.f32 %v772, %v780
        %v789 = vadd.f32 %v773, %v781
        %790 = vst [vmem:[%s193] sm:$0xff] %v782
        %791 = vst [vmem:[%s193 + $0x8] sm:$0xff] %v783
        %792 = vst [vmem:[%s193 + $0x10] sm:$0xff] %v784
        %793 = vst [vmem:[%s193 + $0x18] sm:$0xff] %v785
        %794 = vst [vmem:[%s193 + $0x20] sm:$0xff] %v786
        %795 = vst [vmem:[%s193 + $0x28] sm:$0xff] %v787
        %796 = vst [vmem:[%s193 + $0x30] sm:$0xff] %v788
        %797 = vst [vmem:[%s193 + $0x38] sm:$0xff] %v789
        %s798 = sand.u32 %s115, 1
        %s799 = scalar_lea.sflag [#allocation3], %s798
        %s800 = sand.u32 %s115, 1
        %s801 = smul.addr %s800, 64
        %s802 = scalar_lea.vmem [#allocation2], %s801
        // Predicated region
        $region37: #{tpu_custom_call.1} parent=35 // pred_check
          %p803 = pneg %p125
        $region38: #{tpu_custom_call.1} parent=35 // pred_check_branch
          %805 = sbr.rel (%p803) target = $region40
        $region39: #{tpu_custom_call.1} parent=35 // pred_region
          %s806 = smul.u32 8, %s18
          %808 = vsyncadd %s799, 0
          %s809 = smul.addr %s806, 8
          %s810 = scalar_lea.hbm %s4, %s809
          %s811 = sshll.u32 %s802, 4
          %s812 = int_to_ptr.vmem [resolvable:$true] %s811
          %s813 = sshll.u32 %s810, 4
          %s814 = int_to_ptr.hbm [resolvable:$true] %s813
          %819 = dma.vmem_to_hbm [thread:$0]  %s812, 1024, %s814, %s799, 128, 128, 8
        $region40: #{tpu_custom_call.1} parent=35 // pred_fallthru
          _
      $region36: #{tpu_custom_call.1} parent=5 // pred_fallthru
        _
      %p820 = scmp.le.s32.totalorder 2, %s13
      // Predicated region
      $region41: #{tpu_custom_call.1} parent=5 // pred_check
        %p821 = pneg %p820
      $region42: #{tpu_custom_call.1} parent=5 // pred_check_branch
        %823 = sbr.rel (%p821) target = $region44
      $region43: #{tpu_custom_call.1} parent=5 // pred_region
        %s824 = ssub.s32 %s13, 2
        // Predicated region
        $region45: #{tpu_custom_call.1} parent=43 // pred_check
          %p825 = pneg %p131
        $region46: #{tpu_custom_call.1} parent=43 // pred_check_branch
          %827 = sbr.rel (%p825) target = $region48
        $region47: #{tpu_custom_call.1} parent=43 // pred_region
          %s828 = sand.u32 %s116, 1
          %s829 = scalar_lea.sflag [#allocation3], %s828
          %s830 = sand.u32 %s116, 1
          %s831 = smul.addr %s830, 64
          %s832 = scalar_lea.vmem [#allocation2], %s831
          %834 = dma.done %s829, 1024
        $region48: #{tpu_custom_call.1} parent=43 // pred_fallthru
          _
      $region44: #{tpu_custom_call.1} parent=5 // pred_fallthru
        _
    $region6: #{tpu_custom_call.1} parent=1 // loop_footer
      %s17 = sadd.s32 1, %s13
    $region7: #{tpu_custom_call.1} parent=1 // loop_footer_branch
      %12 = sbr.rel target = $region3
    $region8: #{tpu_custom_call.1} parent=1 // loop_exit
      _
    %835 = vsyncpa [#allocation3], 1
    %s836 = scalar_lea.sflag [#allocation3], 1
    %837 = vsyncpa %s836, 1

</llo_original>
